<compile_context>
chip_gen: v7x
topology: tpu7x:2x2x1
jax: 0.10.0
libtpu: 0.0.40
codegen_flags: <defaults>
</compile_context>

<pallas_src>
import functools

import jax
import jax.numpy as jnp
from jax.experimental import pallas as pl
from jax.experimental.pallas import tpu as pltpu


def _round_up(n, m):
    return ((n + m - 1) // m) * m


def _cdiv(a, b):
    return (a + b - 1) // b


def _feature_pad(n):
    # Lane-dense padding: 128 minimum; 256-align larger dims so K/N map cleanly onto
    # the 256x256 MXUs of v6e/v7x without inflating tiny toy dims.
    return _round_up(n, 256) if n >= 256 else _round_up(n, 128)


def _pad2(a, rows, cols, dtype):
    """Zero-pad a 2-D array to (rows, cols) in `dtype`; no-op copy when already aligned."""
    a = a.astype(dtype)
    if a.shape == (rows, cols):
        return a
    return jnp.zeros((rows, cols), dtype).at[: a.shape[0], : a.shape[1]].set(a)


# ---------------------------------------------------------------------------
# One-time parameter preparation (hoisted out of the per-call path).
# ---------------------------------------------------------------------------
def prepare_params(params, *, mxu_dtype=jnp.bfloat16, fuse_bottleneck=None):
    """Pad / cast / (optionally) fuse the weights once; reuse across forward calls.

    params: ((w1, b1), (w2, b2), (w3, b3), (w4, b4)) with torch.nn.Linear-style
            layouts of [in, out] weights and [1, out] biases.
    mxu_dtype: None -> exact f32 MXU path; jnp.bfloat16 -> bf16 operands, f32 accum.
    """
    (w1, b1), (w2, b2), (w3, b3), (w4, b4) = params
    D, I = w1.shape
    E = w2.shape[1]
    D_pad, I_pad, E_pad = _feature_pad(D), _feature_pad(I), _feature_pad(E)

    if fuse_bottleneck is None:
        # Fuse only when the dense (I_pad x I_pad) pass is no more MXU work / weight
        # bytes than the two skinny passes through the encoded bottleneck.
        fuse_bottleneck = I_pad <= 2 * E_pad

    f32 = jnp.float32
    w_dt = f32 if mxu_dtype is None else mxu_dtype
    hi = jax.lax.Precision.HIGHEST

    if fuse_bottleneck:
        # Valid in eval mode only: no nonlinearity between encoder.fc2 and decoder.fc1.
        w23 = jnp.dot(w2.astype(f32), w3.astype(f32), precision=hi)
        b23 = jnp.dot(b2.astype(f32), w3.astype(f32), precision=hi) + b3.astype(f32)
        arrays = (
            _pad2(w1, D_pad, I_pad, w_dt), _pad2(b1, 1, I_pad, f32),
            _pad2(w23, I_pad, I_pad, w_dt), _pad2(b23, 1, I_pad, f32),
            _pad2(w4, I_pad, D_pad, w_dt), _pad2(b4, 1, D_pad, f32),
        )
    else:
        arrays = (
            _pad2(w1, D_pad, I_pad, w_dt), _pad2(b1, 1, I_pad, f32),
            _pad2(w2, I_pad, E_pad, w_dt), _pad2(b2, 1, E_pad, f32),
            _pad2(w3, E_pad, I_pad, w_dt), _pad2(b3, 1, I_pad, f32),
            _pad2(w4, I_pad, D_pad, w_dt), _pad2(b4, 1, D_pad, f32),
        )
    return {
        "arrays": arrays,
        "fused": bool(fuse_bottleneck),
        "mxu_dtype": mxu_dtype,
        "dims": (D, I, E),
    }


# ---------------------------------------------------------------------------
# Kernel bodies.
# ---------------------------------------------------------------------------
def _make_kernel(fused, mxu_dtype):
    def mm(a, w_ref):
        if mxu_dtype is not None:
            a = a.astype(mxu_dtype)              # bf16 MXU operands, f32 accumulation
        return jnp.dot(a, w_ref[...], preferred_element_type=jnp.float32)

    if fused:
        def kernel(x_ref, w1_ref, b1_ref, w23_ref, b23_ref, w4_ref, b4_ref, out_ref):
            # encoder.fc1 + ReLU  (Dropout = identity in eval mode)
            h = jnp.maximum(mm(x_ref[...], w1_ref) + b1_ref[...], 0.0)
            # fused encoder.fc2 @ decoder.fc1 (+ bias) + ReLU
            h = jnp.maximum(mm(h, w23_ref) + b23_ref[...], 0.0)
            # decoder.fc2 (reconstruction)
            out_ref[...] = (mm(h, w4_ref) + b4_ref[...]).astype(out_ref.dtype)
    else:
        def kernel(x_ref, w1_ref, b1_ref, w2_ref, b2_ref, w3_ref, b3_ref,
                   w4_ref, b4_ref, out_ref):
            h = jnp.maximum(mm(x_ref[...], w1_ref) + b1_ref[...], 0.0)   # enc.fc1 + ReLU
            z = mm(h, w2_ref) + b2_ref[...]                              # enc.fc2 (bottleneck)
            h = jnp.maximum(mm(z, w3_ref) + b3_ref[...], 0.0)            # dec.fc1 + ReLU
            out_ref[...] = (mm(h, w4_ref) + b4_ref[...]).astype(out_ref.dtype)

    return kernel


# ---------------------------------------------------------------------------
# Forward pass.
# ---------------------------------------------------------------------------
@functools.partial(jax.jit, static_argnames=("fused", "mxu_dtype", "batch_tile"))
def _forward_impl(x, weights, *, fused, mxu_dtype, batch_tile):
    B, D = x.shape
    D_pad, I_pad = weights[0].shape              # padded data / intermediate dims
    f32 = jnp.float32

    in_dtype = f32 if mxu_dtype is None else x.dtype
    out_dtype = in_dtype
    in_itemsize = 4 if mxu_dtype is None else x.dtype.itemsize

    # ---- batch tiling sized from a VMEM budget, not a fixed 128 ----
    weight_bytes = sum(int(a.size) * a.dtype.itemsize for a in weights)
    single_buffer = weight_bytes > (4 << 20)     # only worth bothering for big models
    act_bytes_per_row = (
        2 * D_pad * in_itemsize                  # x tile, double-buffered
        + 2 * D_pad * in_itemsize                # out tile, double-buffered
        + 4 * I_pad * 4)                         # live f32 intermediates (rough)
    budget = max((40 << 20) - weight_bytes * (1 if single_buffer else 2), 1 << 20)
    tile_cap = max(budget // act_bytes_per_row, 8)
    tile_req = max(min(batch_tile, tile_cap), 8)

    n_tiles = _cdiv(B, tile_req)
    if B >= 512:
        # keep >= 2 parallel batch tiles so a 2-TensorCore chip (v7x) can shard them
        n_tiles = max(n_tiles, 2)
    sub = 8 if in_itemsize >= 4 else (16 if in_itemsize == 2 else 32)
    tile = _round_up(_cdiv(B, n_tiles), sub)     # even split: <= `sub` wasted rows/tile
    B_pad = n_tiles * tile

    # Pad x only when needed (skipped entirely for already-aligned shapes/dtypes).
    x_p = _pad2(x, B_pad, D_pad, in_dtype)

    def resident(a):
        # Weights/biases: full-array blocks with a constant index map -> fetched once,
        # resident in VMEM across the whole batch grid.  Single-buffer them only when
        # their footprint is big enough to matter (v7x has 64 MiB VMEM).
        if single_buffer:
            return pl.BlockSpec(a.shape, lambda i: (0, 0), pipeline_mode=pl.Buffered(1))
        return pl.BlockSpec(a.shape, lambda i: (0, 0))

    in_specs = [pl.BlockSpec((tile, D_pad), lambda i: (i, 0))]          # x batch tile
    in_specs += [resident(a) for a in weights]

    est_vmem = weight_bytes * (1 if single_buffer else 2) + tile * act_bytes_per_row
    vmem_limit = None
    if est_vmem > (30 << 20):                    # raise scoped VMEM only when needed
        vmem_limit = min(int(est_vmem * 1.25) + (2 << 20), 96 << 20)

    out_p = pl.pallas_call(
        _make_kernel(fused, mxu_dtype),
        out_shape=jax.ShapeDtypeStruct((B_pad, D_pad), out_dtype),
        grid_spec=pltpu.PrefetchScalarGridSpec(
            num_scalar_prefetch=0,
            grid=(n_tiles,),
            in_specs=in_specs,
            out_specs=pl.BlockSpec((tile, D_pad), lambda i: (i, 0)),    # lane-dense output
        ),
        compiler_params=pltpu.CompilerParams(
            dimension_semantics=("parallel",),   # batch tiles independent -> megacore
            vmem_limit_bytes=vmem_limit,
        ),
    )(x_p, *weights)

    if (B_pad, D_pad) != (B, D):
        return out_p[:B, :D]
    return out_p


def autoencoder_forward(x, prepared, *, batch_tile=512):
    """Auto-encoder forward (eval mode).  `prepared` comes from prepare_params()."""
    assert x.shape[1] == prepared["dims"][0], "x feature dim does not match the model"
    return _forward_impl(x, prepared["arrays"], fused=prepared["fused"],
                         mxu_dtype=prepared["mxu_dtype"], batch_tile=batch_tile)


# ---------------------------------------------------------------------------
# Synthetic parameters + pure-JAX reference.
# ---------------------------------------------------------------------------
def init_params(key, data_size, intermediate_size, encoded_size):
    """Deterministic synthetic parameters (shapes mirror torch.nn.Linear)."""
    def linear(k, fan_in, fan_out):
        kw, kb = jax.random.split(k)
        bound = 1.0 / jnp.sqrt(fan_in)
        w = jax.random.uniform(kw, (fan_in, fan_out), jnp.float32, -bound, bound)
        b = jax.random.uniform(kb, (1, fan_out), jnp.float32, -bound, bound)
        return w, b

    k1, k2, k3, k4 = jax.random.split(key, 4)
    return (
        linear(k1, data_size, intermediate_size),     # encoder.fc1
        linear(k2, intermediate_size, encoded_size),  # encoder.fc2
        linear(k3, encoded_size, intermediate_size),  # decoder.fc1
        linear(k4, intermediate_size, data_size),     # decoder.fc2
    )


def reference_forward(x, params):
    """Pure-JAX reference (un-fused, full precision), for correctness checking."""
    (w1, b1), (w2, b2), (w3, b3), (w4, b4) = params
    hi = jax.lax.Precision.HIGHEST
    h1 = jnp.maximum(jnp.dot(x, w1, precision=hi) + b1, 0.0)
    z = jnp.dot(h1, w2, precision=hi) + b2
    h2 = jnp.maximum(jnp.dot(z, w3, precision=hi) + b3, 0.0)
    return jnp.dot(h2, w4, precision=hi) + b4


if __name__ == "__main__":
    key = jax.random.PRNGKey(0)
    k_p1, k_p2, k_x1, k_x2, k_x3 = jax.random.split(key, 5)

    # Config A (small shapes consistent with the module): 128-padding makes the
    # bottleneck as wide as the intermediate layer -> fusion kicks in.
    data_size, inter, enc = 32, 64, 16
    params_a = init_params(k_p1, data_size, inter, enc)

    # --- 1) exact f32 MXU path, single tile, tight tolerance ---
    prep_f32 = prepare_params(params_a, mxu_dtype=None)
    assert prep_f32["fused"]
    x_small = jax.random.normal(k_x1, (16, data_size), jnp.float32)
    out = jax.block_until_ready(autoencoder_forward(x_small, prep_f32))
    ref = reference_forward(x_small, params_a)
    assert out.shape == x_small.shape and out.dtype == jnp.float32
    assert jnp.allclose(out, ref, atol=1e-4, rtol=1e-4), "f32 path mismatch"

    # --- 2) default bf16-weight MXU path, multi-tile batch (>= 2 parallel tiles) ---
    prep_bf16 = prepare_params(params_a)          # mxu_dtype = bf16 by default
    x_big = jax.random.normal(k_x2, (1024, data_size), jnp.float32)
    out = jax.block_until_ready(autoencoder_forward(x_big, prep_bf16, batch_tile=512))
    ref = reference_forward(x_big, params_a)
    assert out.shape == x_big.shape
    assert jnp.allclose(out, ref, atol=5e-2, rtol=5e-2), "bf16-weight path mismatch"

    # --- 3) bf16 activations end-to-end (bf16 in -> bf16 out) ---
    x_bf16 = x_big.astype(jnp.bfloat16)
    out = jax.block_until_ready(autoencoder_forward(x_bf16, prep_bf16, batch_tile=512))
    assert out.dtype == jnp.bfloat16 and out.shape == x_big.shape
    ref = reference_forward(x_bf16.astype(jnp.float32), params_a)
    assert jnp.allclose(out.astype(jnp.float32), ref, atol=1e-1, rtol=1e-1), \
        "bf16-activation path mismatch"

    # --- 4) encoded << intermediate: fusion skipped, 4-matmul kernel, ragged batch ---
    data_b, inter_b, enc_b = 32, 512, 64
    params_b = init_params(k_p2, data_b, inter_b, enc_b)
    prep_b = prepare_params(params_b, mxu_dtype=None)
    assert not prep_b["fused"]
    x_rag = jax.random.normal(k_x3, (100, data_b), jnp.float32)   # needs batch padding
    out = jax.block_until_ready(autoencoder_forward(x_rag, prep_b))
    ref = reference_forward(x_rag, params_b)
    assert out.shape == x_rag.shape
    assert jnp.allclose(out, ref, atol=1e-4, rtol=1e-4), "unfused f32 path mismatch"

    print("KERNEL_OK")
</pallas_src>

<mosaic_0001>
module attributes {stable_mosaic.version = 11 : i64} {
  func.func @kernel(%arg0: i32, %arg1: memref<16x128xf32, #tpu.memory_space<vmem>>, %arg2: memref<128x128xf32, #tpu.memory_space<vmem>>, %arg3: memref<1x128xf32, #tpu.memory_space<vmem>>, %arg4: memref<128x128xf32, #tpu.memory_space<vmem>>, %arg5: memref<1x128xf32, #tpu.memory_space<vmem>>, %arg6: memref<128x128xf32, #tpu.memory_space<vmem>>, %arg7: memref<1x128xf32, #tpu.memory_space<vmem>>, %arg8: memref<16x128xf32, #tpu.memory_space<vmem>>) attributes {dimension_semantics = [#tpu.dimension_semantics<parallel>], iteration_bounds = array<i64: 1>, scalar_prefetch = 0 : i64, scratch_operands = 0 : i64, tpu.core_type = #tpu.core_type<tc>, window_params = [{transform_indices = @transform_0, window_bounds = array<i64: 16, 128>}, {pipeline_mode = #tpu.pipeline_mode<synchronous>, transform_indices = @transform_1, window_bounds = array<i64: 128, 128>}, {pipeline_mode = #tpu.pipeline_mode<synchronous>, transform_indices = @transform_2, window_bounds = array<i64: 1, 128>}, {pipeline_mode = #tpu.pipeline_mode<synchronous>, transform_indices = @transform_3, window_bounds = array<i64: 128, 128>}, {pipeline_mode = #tpu.pipeline_mode<synchronous>, transform_indices = @transform_4, window_bounds = array<i64: 1, 128>}, {pipeline_mode = #tpu.pipeline_mode<synchronous>, transform_indices = @transform_5, window_bounds = array<i64: 128, 128>}, {pipeline_mode = #tpu.pipeline_mode<synchronous>, transform_indices = @transform_6, window_bounds = array<i64: 1, 128>}, {transform_indices = @transform_7, window_bounds = array<i64: 16, 128>}]} {
    %c0 = arith.constant 0 : index
    %c0_0 = arith.constant 0 : index
    %0 = vector.load %arg1[%c0, %c0_0] : memref<16x128xf32, #tpu.memory_space<vmem>>, vector<16x128xf32>
    %c0_1 = arith.constant 0 : index
    %c0_2 = arith.constant 0 : index
    %1 = vector.load %arg2[%c0_1, %c0_2] : memref<128x128xf32, #tpu.memory_space<vmem>>, vector<128x128xf32>
    %cst = arith.constant dense<0.000000e+00> : vector<16x128xf32>
    %2 = tpu.matmul %0, %1, %cst {dimension_numbers = #tpu.dot_dimension_numbers<[1], [0], [0], [1], [0, 0, 1, 1], [], []>} : vector<16x128xf32>, vector<128x128xf32>, vector<16x128xf32> -> vector<16x128xf32>
    %c0_3 = arith.constant 0 : index
    %c0_4 = arith.constant 0 : index
    %3 = vector.load %arg3[%c0_3, %c0_4] : memref<1x128xf32, #tpu.memory_space<vmem>>, vector<1x128xf32>
    %4 = vector.broadcast %3 : vector<1x128xf32> to vector<16x128xf32>
    %5 = arith.addf %2, %4 : vector<16x128xf32>
    %cst_5 = arith.constant 0.000000e+00 : f32
    %6 = vector.broadcast %cst_5 : f32 to vector<16x128xf32>
    %7 = arith.maximumf %5, %6 : vector<16x128xf32>
    %c0_6 = arith.constant 0 : index
    %c0_7 = arith.constant 0 : index
    %8 = vector.load %arg4[%c0_6, %c0_7] : memref<128x128xf32, #tpu.memory_space<vmem>>, vector<128x128xf32>
    %cst_8 = arith.constant dense<0.000000e+00> : vector<16x128xf32>
    %9 = tpu.matmul %7, %8, %cst_8 {dimension_numbers = #tpu.dot_dimension_numbers<[1], [0], [0], [1], [0, 0, 1, 1], [], []>} : vector<16x128xf32>, vector<128x128xf32>, vector<16x128xf32> -> vector<16x128xf32>
    %c0_9 = arith.constant 0 : index
    %c0_10 = arith.constant 0 : index
    %10 = vector.load %arg5[%c0_9, %c0_10] : memref<1x128xf32, #tpu.memory_space<vmem>>, vector<1x128xf32>
    %11 = vector.broadcast %10 : vector<1x128xf32> to vector<16x128xf32>
    %12 = arith.addf %9, %11 : vector<16x128xf32>
    %cst_11 = arith.constant 0.000000e+00 : f32
    %13 = vector.broadcast %cst_11 : f32 to vector<16x128xf32>
    %14 = arith.maximumf %12, %13 : vector<16x128xf32>
    %c0_12 = arith.constant 0 : index
    %c0_13 = arith.constant 0 : index
    %15 = vector.load %arg6[%c0_12, %c0_13] : memref<128x128xf32, #tpu.memory_space<vmem>>, vector<128x128xf32>
    %cst_14 = arith.constant dense<0.000000e+00> : vector<16x128xf32>
    %16 = tpu.matmul %14, %15, %cst_14 {dimension_numbers = #tpu.dot_dimension_numbers<[1], [0], [0], [1], [0, 0, 1, 1], [], []>} : vector<16x128xf32>, vector<128x128xf32>, vector<16x128xf32> -> vector<16x128xf32>
    %c0_15 = arith.constant 0 : index
    %c0_16 = arith.constant 0 : index
    %17 = vector.load %arg7[%c0_15, %c0_16] : memref<1x128xf32, #tpu.memory_space<vmem>>, vector<1x128xf32>
    %18 = vector.broadcast %17 : vector<1x128xf32> to vector<16x128xf32>
    %19 = arith.addf %16, %18 : vector<16x128xf32>
    %c0_17 = arith.constant 0 : index
    %c0_18 = arith.constant 0 : index
    %20 = vector.load %arg8[%c0_17, %c0_18] : memref<16x128xf32, #tpu.memory_space<vmem>>, vector<16x128xf32>
    tpu.vector_store %arg8[%c0_17, %c0_18], %19 {strides = array<i32>} : memref<16x128xf32, #tpu.memory_space<vmem>>, vector<16x128xf32>,
    return
  }
  func.func @transform_0(%arg0: i32) -> (i32, i32) {
    %c0_i32 = arith.constant 0 : i32
    %c0_i32_0 = arith.constant 0 : i32
    return %arg0, %c0_i32 : i32, i32
  }
  func.func @transform_1(%arg0: i32) -> (i32, i32) {
    %c0_i32 = arith.constant 0 : i32
    %c0_i32_0 = arith.constant 0 : i32
    %c0_i32_1 = arith.constant 0 : i32
    return %c0_i32, %c0_i32_0 : i32, i32
  }
  func.func @transform_2(%arg0: i32) -> (i32, i32) {
    %c0_i32 = arith.constant 0 : i32
    %c0_i32_0 = arith.constant 0 : i32
    %c0_i32_1 = arith.constant 0 : i32
    return %c0_i32, %c0_i32_0 : i32, i32
  }
  func.func @transform_3(%arg0: i32) -> (i32, i32) {
    %c0_i32 = arith.constant 0 : i32
    %c0_i32_0 = arith.constant 0 : i32
    %c0_i32_1 = arith.constant 0 : i32
    return %c0_i32, %c0_i32_0 : i32, i32
  }
  func.func @transform_4(%arg0: i32) -> (i32, i32) {
    %c0_i32 = arith.constant 0 : i32
    %c0_i32_0 = arith.constant 0 : i32
    %c0_i32_1 = arith.constant 0 : i32
    return %c0_i32, %c0_i32_0 : i32, i32
  }
  func.func @transform_5(%arg0: i32) -> (i32, i32) {
    %c0_i32 = arith.constant 0 : i32
    %c0_i32_0 = arith.constant 0 : i32
    %c0_i32_1 = arith.constant 0 : i32
    return %c0_i32, %c0_i32_0 : i32, i32
  }
  func.func @transform_6(%arg0: i32) -> (i32, i32) {
    %c0_i32 = arith.constant 0 : i32
    %c0_i32_0 = arith.constant 0 : i32
    %c0_i32_1 = arith.constant 0 : i32
    return %c0_i32, %c0_i32_0 : i32, i32
  }
  func.func @transform_7(%arg0: i32) -> (i32, i32) {
    %c0_i32 = arith.constant 0 : i32
    %c0_i32_0 = arith.constant 0 : i32
    return %arg0, %c0_i32 : i32, i32
  }
}

</mosaic_0001>

<llo_original>
// kernel: _forward_impl.1
$region0: #{_forward_impl.1}
  #allocation0 [shape = 'u32[]', space=smem, size = 0x4, offset = 0x4, fixed_abs, tag = 'smem constant byte address 0x4 - core index']
  #allocation1 [shape = 'u32[144,128]{1,0:T(1,128)}', space=vmem, size = 0x12000, scoped, tag = 'internal scratch']
  %s0 = inlined_call_operand.vmem [shape: f32[16,128], index: 0, kind: input, shape index: {}]
  %s1 = inlined_call_operand.hbm [shape: f32[128,128], index: 1, kind: input, shape index: {}]
  %s2 = inlined_call_operand.vmem [shape: f32[1,128], index: 2, kind: input, shape index: {}]
  %s3 = inlined_call_operand.hbm [shape: f32[128,128], index: 3, kind: input, shape index: {}]
  %s4 = inlined_call_operand.vmem [shape: f32[1,128], index: 4, kind: input, shape index: {}]
  %s5 = inlined_call_operand.hbm [shape: f32[128,128], index: 5, kind: input, shape index: {}]
  %s6 = inlined_call_operand.vmem [shape: f32[1,128], index: 6, kind: input, shape index: {}]
  %s7 = inlined_call_operand.hbm [shape: f32[16,128], index: 7, kind: output, shape index: {}]
  %s8 = sld [smem:[#allocation0]]
  $region50: #{_forward_impl.1} parent=0
    _
  %s10 = ssub.s32 1, %s8
  %s11 = scalar_select 0, %s10, %s8
  $region1: #{_forward_impl.1} parent=0
    #allocation2 [shape = 'u8[65536]{0}', space=vmem, size = 0x10000, scoped, tag = 'input window, operand 1, single buffered']
    #allocation3 [shape = 's32[1]{0}', space=sflag, size = 0x4, scoped, tag = 'scoped memory for _forward_impl.1']
    #allocation4 [shape = 's32[1]{0}', space=sflag, size = 0x4, scoped, tag = 'scoped memory for _forward_impl.1']
    #allocation5 [shape = 'u8[65536]{0}', space=vmem, size = 0x10000, scoped, tag = 'input window, operand 3, single buffered']
    #allocation6 [shape = 's32[1]{0}', space=sflag, size = 0x4, scoped, tag = 'scoped memory for _forward_impl.1']
    #allocation7 [shape = 'u8[65536]{0}', space=vmem, size = 0x10000, scoped, tag = 'input window, operand 5, single buffered']
    #allocation8 [shape = 'u8[8192]{0}', space=vmem, size = 0x2000, scoped, tag = 'output window, operand 0, single buffered']
    %12 = vsyncpa [#allocation3], 0
    %13 = vsyncpa [#allocation6], 0
    %14 = vsyncpa [#allocation4], 0
    // Predicated region
    $region2: #{_forward_impl.1} parent=1 // pred_check
      _
    $region3: #{_forward_impl.1} parent=1 // pred_check_branch
      %16 = sbr.rel (0) target = $region5
    $region4: #{_forward_impl.1} parent=1 // pred_region
      _
    $region5: #{_forward_impl.1} parent=1 // pred_fallthru
      _
    // Predicated region
    $region6: #{_forward_impl.1} parent=1 // pred_check
      _
    $region7: #{_forward_impl.1} parent=1 // pred_check_branch
      %18 = sbr.rel (0) target = $region9
    $region8: #{_forward_impl.1} parent=1 // pred_region
      %s20 = ssub.s32 2048, 2048
      %21 = vsyncadd [#allocation3], %s20
      %s22 = sshll.u32 [#allocation2], 4
      %s23 = int_to_ptr.vmem [resolvable:$true] %s22
      %28 = dma.hbm_to_vmem [thread:$0]  %s1, 2048, %s23, [#allocation3], 128, 128, 8
    $region9: #{_forward_impl.1} parent=1 // pred_fallthru
      _
    // Predicated region
    $region10: #{_forward_impl.1} parent=1 // pred_check
      _
    $region11: #{_forward_impl.1} parent=1 // pred_check_branch
      %30 = sbr.rel (0) target = $region13
    $region12: #{_forward_impl.1} parent=1 // pred_region
      _
    $region13: #{_forward_impl.1} parent=1 // pred_fallthru
      _
    // Predicated region
    $region14: #{_forward_impl.1} parent=1 // pred_check
      _
    $region15: #{_forward_impl.1} parent=1 // pred_check_branch
      %32 = sbr.rel (0) target = $region17
    $region16: #{_forward_impl.1} parent=1 // pred_region
      %s34 = ssub.s32 2048, 2048
      %35 = vsyncadd [#allocation6], %s34
      %s36 = sshll.u32 [#allocation5], 4
      %s37 = int_to_ptr.vmem [resolvable:$true] %s36
      %42 = dma.hbm_to_vmem [thread:$0]  %s3, 2048, %s37, [#allocation6], 128, 128, 8
    $region17: #{_forward_impl.1} parent=1 // pred_fallthru
      _
    // Predicated region
    $region18: #{_forward_impl.1} parent=1 // pred_check
      _
    $region19: #{_forward_impl.1} parent=1 // pred_check_branch
      %44 = sbr.rel (0) target = $region21
    $region20: #{_forward_impl.1} parent=1 // pred_region
      _
    $region21: #{_forward_impl.1} parent=1 // pred_fallthru
      _
    // Predicated region
    $region22: #{_forward_impl.1} parent=1 // pred_check
      _
    $region23: #{_forward_impl.1} parent=1 // pred_check_branch
      %46 = sbr.rel (0) target = $region25
    $region24: #{_forward_impl.1} parent=1 // pred_region
      %s48 = ssub.s32 2048, 2048
      %49 = vsyncadd [#allocation6], %s48
      %s50 = sshll.u32 [#allocation7], 4
      %s51 = int_to_ptr.vmem [resolvable:$true] %s50
      %56 = dma.hbm_to_vmem [thread:$0]  %s5, 2048, %s51, [#allocation6], 128, 128, 8
    $region25: #{_forward_impl.1} parent=1 // pred_fallthru
      _
    // Predicated region
    $region26: #{_forward_impl.1} parent=1 // pred_check
      _
    $region27: #{_forward_impl.1} parent=1 // pred_check_branch
      %58 = sbr.rel (0) target = $region29
    $region28: #{_forward_impl.1} parent=1 // pred_region
      _
    $region29: #{_forward_impl.1} parent=1 // pred_fallthru
      _
    // Predicated region
    $region30: #{_forward_impl.1} parent=1 // pred_check
      _
    $region31: #{_forward_impl.1} parent=1 // pred_check_branch
      %60 = sbr.rel (0) target = $region33
    $region32: #{_forward_impl.1} parent=1 // pred_region
      %61 = dma.done [#allocation3], 2048
    $region33: #{_forward_impl.1} parent=1 // pred_fallthru
      _
    // Predicated region
    $region34: #{_forward_impl.1} parent=1 // pred_check
      _
    $region35: #{_forward_impl.1} parent=1 // pred_check_branch
      %63 = sbr.rel (0) target = $region37
    $region36: #{_forward_impl.1} parent=1 // pred_region
      %64 = dma.done [#allocation6], 2048
    $region37: #{_forward_impl.1} parent=1 // pred_fallthru
      _
    // Predicated region
    $region38: #{_forward_impl.1} parent=1 // pred_check
      _
    $region39: #{_forward_impl.1} parent=1 // pred_check_branch
      %66 = sbr.rel (0) target = $region41
    $region40: #{_forward_impl.1} parent=1 // pred_region
      %67 = dma.done [#allocation6], 2048
    $region41: #{_forward_impl.1} parent=1 // pred_fallthru
      _
    %v68 = vld [vmem:[%s0] sm:$0xff]
    %v69 = vld [vmem:[%s0 + $0x8] sm:$0xff]
    %v70 = vld [vmem:[#allocation2] sm:$0xff]
    %v71 = vld [vmem:[#allocation2 + $0x8] sm:$0xff]
    %v72 = vld [vmem:[#allocation2 + $0x10] sm:$0xff]
    %v73 = vld [vmem:[#allocation2 + $0x18] sm:$0xff]
    %v74 = vld [vmem:[#allocation2 + $0x20] sm:$0xff]
    %v75 = vld [vmem:[#allocation2 + $0x28] sm:$0xff]
    %v76 = vld [vmem:[#allocation2 + $0x30] sm:$0xff]
    %v77 = vld [vmem:[#allocation2 + $0x38] sm:$0xff]
    %v78 = vld [vmem:[#allocation2 + $0x40] sm:$0xff]
    %v79 = vld [vmem:[#allocation2 + $0x48] sm:$0xff]
    %v80 = vld [vmem:[#allocation2 + $0x50] sm:$0xff]
    %v81 = vld [vmem:[#allocation2 + $0x58] sm:$0xff]
    %v82 = vld [vmem:[#allocation2 + $0x60] sm:$0xff]
    %v83 = vld [vmem:[#allocation2 + $0x68] sm:$0xff]
    %v84 = vld [vmem:[#allocation2 + $0x70] sm:$0xff]
    %v85 = vld [vmem:[#allocation2 + $0x78] sm:$0xff]
    %v86 = vld [vmem:[%s2] sm:$0x1]
    %v88 = vlaneseq
    %v89 = vshrl.u32 %v88, 7
    %v90 = vsub.s32 0, %v89
    %v91 = vrot.slane %v86, %v90
    %93 = vmatprep.subr.mxu0 0.0
    %94 = vmatpush1.msra.mxu0 %v70
    %95 = vmatprep.subr.mxu0 0.0
    %96 = vmatpush1.msra.mxu0 %v71
    %97 = vmatprep.subr.mxu0 0.0
    %98 = vmatpush1.msra.mxu0 %v72
    %99 = vmatprep.subr.mxu0 0.0
    %100 = vmatpush1.msra.mxu0 %v73
    %101 = vmatprep.subr.mxu0 0.0
    %102 = vmatpush1.msra.mxu0 %v74
    %103 = vmatprep.subr.mxu0 0.0
    %104 = vmatpush1.msra.mxu0 %v75
    %105 = vmatprep.subr.mxu0 0.0
    %106 = vmatpush1.msra.mxu0 %v76
    %107 = vmatprep.subr.mxu0 0.0
    %108 = vmatpush1.msra.mxu0 %v77
    %109 = vmatprep.subr.mxu0 0.0
    %110 = vmatpush1.msra.mxu0 %v78
    %111 = vmatprep.subr.mxu0 0.0
    %112 = vmatpush1.msra.mxu0 %v79
    %113 = vmatprep.subr.mxu0 0.0
    %114 = vmatpush1.msra.mxu0 %v80
    %115 = vmatprep.subr.mxu0 0.0
    %116 = vmatpush1.msra.mxu0 %v81
    %117 = vmatprep.subr.mxu0 0.0
    %118 = vmatpush1.msra.mxu0 %v82
    %119 = vmatprep.subr.mxu0 0.0
    %120 = vmatpush1.msra.mxu0 %v83
    %121 = vmatprep.subr.mxu0 0.0
    %122 = vmatpush1.msra.mxu0 %v84
    %123 = vmatprep.subr.mxu0 0.0
    %124 = vmatpush1.msra.mxu0 %v85
    %125 = vmatprep.subr.mxu0 0.0
    %126 = vmatpush1.msra.mxu0 0.0
    %127 = vmatprep.subr.mxu0 0.0
    %128 = vmatpush1.msra.mxu0 0.0
    %129 = vmatprep.subr.mxu0 0.0
    %130 = vmatpush1.msra.mxu0 0.0
    %131 = vmatprep.subr.mxu0 0.0
    %132 = vmatpush1.msra.mxu0 0.0
    %133 = vmatprep.subr.mxu0 0.0
    %134 = vmatpush1.msra.mxu0 0.0
    %135 = vmatprep.subr.mxu0 0.0
    %136 = vmatpush1.msra.mxu0 0.0
    %137 = vmatprep.subr.mxu0 0.0
    %138 = vmatpush1.msra.mxu0 0.0
    %139 = vmatprep.subr.mxu0 0.0
    %140 = vmatpush1.msra.mxu0 0.0
    %141 = vmatprep.subr.mxu0 0.0
    %142 = vmatpush1.msra.mxu0 0.0
    %143 = vmatprep.subr.mxu0 0.0
    %144 = vmatpush1.msra.mxu0 0.0
    %145 = vmatprep.subr.mxu0 0.0
    %146 = vmatpush1.msra.mxu0 0.0
    %147 = vmatprep.subr.mxu0 0.0
    %148 = vmatpush1.msra.mxu0 0.0
    %149 = vmatprep.subr.mxu0 0.0
    %150 = vmatpush1.msra.mxu0 0.0
    %151 = vmatprep.subr.mxu0 0.0
    %152 = vmatpush1.msra.mxu0 0.0
    %153 = vmatprep.subr.mxu0 0.0
    %154 = vmatpush1.msra.mxu0 0.0
    %155 = vmatprep.subr.mxu0 0.0
    %156 = vmatpush1.msra.mxu0 0.0
    %157 = vmatprep.mubr.f32.mxu0 0.0
    %158 = vmatmul.mubr.f32.gmra.mrb[0].mxu0 %v68
    %v159 = vpop.f32.mrb[0].mxu0
    %v160 = vadd.f32 %v91, %v159
    %v161 = vpop.f32.mrb[0].mxu0
    %162 = vmatprep.mubr.f32.mxu0 0.0
    %163 = vmatmul.mubr.f32.gmra.mrb[0].mxu0 %v69
    %v164 = vpop.f32.mrb[0].mxu0
    %v165 = vadd.f32 %v91, %v164
    %v166 = vpop.f32.mrb[0].mxu0
    %167 = vdwg.mxu0
    %v168 = vmax.f32 %v160, 0.0
    %v169 = vmax.f32 %v165, 0.0
    %v170 = vld [vmem:[#allocation5] sm:$0xff]
    %v171 = vld [vmem:[#allocation5 + $0x8] sm:$0xff]
    %v172 = vld [vmem:[#allocation5 + $0x10] sm:$0xff]
    %v173 = vld [vmem:[#allocation5 + $0x18] sm:$0xff]
    %v174 = vld [vmem:[#allocation5 + $0x20] sm:$0xff]
    %v175 = vld [vmem:[#allocation5 + $0x28] sm:$0xff]
    %v176 = vld [vmem:[#allocation5 + $0x30] sm:$0xff]
    %v177 = vld [vmem:[#allocation5 + $0x38] sm:$0xff]
    %v178 = vld [vmem:[#allocation5 + $0x40] sm:$0xff]
    %v179 = vld [vmem:[#allocation5 + $0x48] sm:$0xff]
    %v180 = vld [vmem:[#allocation5 + $0x50] sm:$0xff]
    %v181 = vld [vmem:[#allocation5 + $0x58] sm:$0xff]
    %v182 = vld [vmem:[#allocation5 + $0x60] sm:$0xff]
    %v183 = vld [vmem:[#allocation5 + $0x68] sm:$0xff]
    %v184 = vld [vmem:[#allocation5 + $0x70] sm:$0xff]
    %v185 = vld [vmem:[#allocation5 + $0x78] sm:$0xff]
    %v186 = vld [vmem:[%s4] sm:$0x1]
    %v188 = vlaneseq
    %v189 = vshrl.u32 %v188, 7
    %v190 = vsub.s32 0, %v189
    %v191 = vrot.slane %v186, %v190
    %193 = vmatprep.subr.mxu0 0.0
    %194 = vmatpush1.msra.mxu0 %v170
    %195 = vmatprep.subr.mxu0 0.0
    %196 = vmatpush1.msra.mxu0 %v171
    %197 = vmatprep.subr.mxu0 0.0
    %198 = vmatpush1.msra.mxu0 %v172
    %199 = vmatprep.subr.mxu0 0.0
    %200 = vmatpush1.msra.mxu0 %v173
    %201 = vmatprep.subr.mxu0 0.0
    %202 = vmatpush1.msra.mxu0 %v174
    %203 = vmatprep.subr.mxu0 0.0
    %204 = vmatpush1.msra.mxu0 %v175
    %205 = vmatprep.subr.mxu0 0.0
    %206 = vmatpush1.msra.mxu0 %v176
    %207 = vmatprep.subr.mxu0 0.0
    %208 = vmatpush1.msra.mxu0 %v177
    %209 = vmatprep.subr.mxu0 0.0
    %210 = vmatpush1.msra.mxu0 %v178
    %211 = vmatprep.subr.mxu0 0.0
    %212 = vmatpush1.msra.mxu0 %v179
    %213 = vmatprep.subr.mxu0 0.0
    %214 = vmatpush1.msra.mxu0 %v180
    %215 = vmatprep.subr.mxu0 0.0
    %216 = vmatpush1.msra.mxu0 %v181
    %217 = vmatprep.subr.mxu0 0.0
    %218 = vmatpush1.msra.mxu0 %v182
    %219 = vmatprep.subr.mxu0 0.0
    %220 = vmatpush1.msra.mxu0 %v183
    %221 = vmatprep.subr.mxu0 0.0
    %222 = vmatpush1.msra.mxu0 %v184
    %223 = vmatprep.subr.mxu0 0.0
    %224 = vmatpush1.msra.mxu0 %v185
    %225 = vmatprep.subr.mxu0 0.0
    %226 = vmatpush1.msra.mxu0 0.0
    %227 = vmatprep.subr.mxu0 0.0
    %228 = vmatpush1.msra.mxu0 0.0
    %229 = vmatprep.subr.mxu0 0.0
    %230 = vmatpush1.msra.mxu0 0.0
    %231 = vmatprep.subr.mxu0 0.0
    %232 = vmatpush1.msra.mxu0 0.0
    %233 = vmatprep.subr.mxu0 0.0
    %234 = vmatpush1.msra.mxu0 0.0
    %235 = vmatprep.subr.mxu0 0.0
    %236 = vmatpush1.msra.mxu0 0.0
    %237 = vmatprep.subr.mxu0 0.0
    %238 = vmatpush1.msra.mxu0 0.0
    %239 = vmatprep.subr.mxu0 0.0
    %240 = vmatpush1.msra.mxu0 0.0
    %241 = vmatprep.subr.mxu0 0.0
    %242 = vmatpush1.msra.mxu0 0.0
    %243 = vmatprep.subr.mxu0 0.0
    %244 = vmatpush1.msra.mxu0 0.0
    %245 = vmatprep.subr.mxu0 0.0
    %246 = vmatpush1.msra.mxu0 0.0
    %247 = vmatprep.subr.mxu0 0.0
    %248 = vmatpush1.msra.mxu0 0.0
    %249 = vmatprep.subr.mxu0 0.0
    %250 = vmatpush1.msra.mxu0 0.0
    %251 = vmatprep.subr.mxu0 0.0
    %252 = vmatpush1.msra.mxu0 0.0
    %253 = vmatprep.subr.mxu0 0.0
    %254 = vmatpush1.msra.mxu0 0.0
    %255 = vmatprep.subr.mxu0 0.0
    %256 = vmatpush1.msra.mxu0 0.0
    %257 = vmatprep.mubr.f32.mxu0 0.0
    %258 = vmatmul.mubr.f32.gmra.mrb[0].mxu0 %v168
    %v259 = vpop.f32.mrb[0].mxu0
    %v260 = vadd.f32 %v191, %v259
    %v261 = vpop.f32.mrb[0].mxu0
    %262 = vmatprep.mubr.f32.mxu0 0.0
    %263 = vmatmul.mubr.f32.gmra.mrb[0].mxu0 %v169
    %v264 = vpop.f32.mrb[0].mxu0
    %v265 = vadd.f32 %v191, %v264
    %v266 = vpop.f32.mrb[0].mxu0
    %267 = vdwg.mxu0
    %v268 = vmax.f32 %v260, 0.0
    %v269 = vmax.f32 %v265, 0.0
    %v270 = vld [vmem:[#allocation7] sm:$0xff]
    %v271 = vld [vmem:[#allocation7 + $0x8] sm:$0xff]
    %v272 = vld [vmem:[#allocation7 + $0x10] sm:$0xff]
    %v273 = vld [vmem:[#allocation7 + $0x18] sm:$0xff]
    %v274 = vld [vmem:[#allocation7 + $0x20] sm:$0xff]
    %v275 = vld [vmem:[#allocation7 + $0x28] sm:$0xff]
    %v276 = vld [vmem:[#allocation7 + $0x30] sm:$0xff]
    %v277 = vld [vmem:[#allocation7 + $0x38] sm:$0xff]
    %v278 = vld [vmem:[#allocation7 + $0x40] sm:$0xff]
    %v279 = vld [vmem:[#allocation7 + $0x48] sm:$0xff]
    %v280 = vld [vmem:[#allocation7 + $0x50] sm:$0xff]
    %v281 = vld [vmem:[#allocation7 + $0x58] sm:$0xff]
    %v282 = vld [vmem:[#allocation7 + $0x60] sm:$0xff]
    %v283 = vld [vmem:[#allocation7 + $0x68] sm:$0xff]
    %v284 = vld [vmem:[#allocation7 + $0x70] sm:$0xff]
    %v285 = vld [vmem:[#allocation7 + $0x78] sm:$0xff]
    %v286 = vld [vmem:[%s6] sm:$0x1]
    %v288 = vlaneseq
    %v289 = vshrl.u32 %v288, 7
    %v290 = vsub.s32 0, %v289
    %v291 = vrot.slane %v286, %v290
    %293 = vmatprep.subr.mxu0 0.0
    %294 = vmatpush1.msra.mxu0 %v270
    %295 = vmatprep.subr.mxu0 0.0
    %296 = vmatpush1.msra.mxu0 %v271
    %297 = vmatprep.subr.mxu0 0.0
    %298 = vmatpush1.msra.mxu0 %v272
    %299 = vmatprep.subr.mxu0 0.0
    %300 = vmatpush1.msra.mxu0 %v273
    %301 = vmatprep.subr.mxu0 0.0
    %302 = vmatpush1.msra.mxu0 %v274
    %303 = vmatprep.subr.mxu0 0.0
    %304 = vmatpush1.msra.mxu0 %v275
    %305 = vmatprep.subr.mxu0 0.0
    %306 = vmatpush1.msra.mxu0 %v276
    %307 = vmatprep.subr.mxu0 0.0
    %308 = vmatpush1.msra.mxu0 %v277
    %309 = vmatprep.subr.mxu0 0.0
    %310 = vmatpush1.msra.mxu0 %v278
    %311 = vmatprep.subr.mxu0 0.0
    %312 = vmatpush1.msra.mxu0 %v279
    %313 = vmatprep.subr.mxu0 0.0
    %314 = vmatpush1.msra.mxu0 %v280
    %315 = vmatprep.subr.mxu0 0.0
    %316 = vmatpush1.msra.mxu0 %v281
    %317 = vmatprep.subr.mxu0 0.0
    %318 = vmatpush1.msra.mxu0 %v282
    %319 = vmatprep.subr.mxu0 0.0
    %320 = vmatpush1.msra.mxu0 %v283
    %321 = vmatprep.subr.mxu0 0.0
    %322 = vmatpush1.msra.mxu0 %v284
    %323 = vmatprep.subr.mxu0 0.0
    %324 = vmatpush1.msra.mxu0 %v285
    %325 = vmatprep.subr.mxu0 0.0
    %326 = vmatpush1.msra.mxu0 0.0
    %327 = vmatprep.subr.mxu0 0.0
    %328 = vmatpush1.msra.mxu0 0.0
    %329 = vmatprep.subr.mxu0 0.0
    %330 = vmatpush1.msra.mxu0 0.0
    %331 = vmatprep.subr.mxu0 0.0
    %332 = vmatpush1.msra.mxu0 0.0
    %333 = vmatprep.subr.mxu0 0.0
    %334 = vmatpush1.msra.mxu0 0.0
    %335 = vmatprep.subr.mxu0 0.0
    %336 = vmatpush1.msra.mxu0 0.0
    %337 = vmatprep.subr.mxu0 0.0
    %338 = vmatpush1.msra.mxu0 0.0
    %339 = vmatprep.subr.mxu0 0.0
    %340 = vmatpush1.msra.mxu0 0.0
    %341 = vmatprep.subr.mxu0 0.0
    %342 = vmatpush1.msra.mxu0 0.0
    %343 = vmatprep.subr.mxu0 0.0
    %344 = vmatpush1.msra.mxu0 0.0
    %345 = vmatprep.subr.mxu0 0.0
    %346 = vmatpush1.msra.mxu0 0.0
    %347 = vmatprep.subr.mxu0 0.0
    %348 = vmatpush1.msra.mxu0 0.0
    %349 = vmatprep.subr.mxu0 0.0
    %350 = vmatpush1.msra.mxu0 0.0
    %351 = vmatprep.subr.mxu0 0.0
    %352 = vmatpush1.msra.mxu0 0.0
    %353 = vmatprep.subr.mxu0 0.0
    %354 = vmatpush1.msra.mxu0 0.0
    %355 = vmatprep.subr.mxu0 0.0
    %356 = vmatpush1.msra.mxu0 0.0
    %357 = vmatprep.mubr.f32.mxu0 0.0
    %358 = vmatmul.mubr.f32.gmra.mrb[0].mxu0 %v268
    %v359 = vpop.f32.mrb[0].mxu0
    %v360 = vadd.f32 %v291, %v359
    %v361 = vpop.f32.mrb[0].mxu0
    %362 = vmatprep.mubr.f32.mxu0 0.0
    %363 = vmatmul.mubr.f32.gmra.mrb[0].mxu0 %v269
    %v364 = vpop.f32.mrb[0].mxu0
    %v365 = vadd.f32 %v291, %v364
    %v366 = vpop.f32.mrb[0].mxu0
    %367 = vdwg.mxu0
    %368 = vst [vmem:[#allocation8] sm:$0xff] %v360
    %369 = vst [vmem:[#allocation8 + $0x8] sm:$0xff] %v365
    // Predicated region
    $region42: #{_forward_impl.1} parent=1 // pred_check
      _
    $region43: #{_forward_impl.1} parent=1 // pred_check_branch
      %371 = sbr.rel (0) target = $region45
    $region44: #{_forward_impl.1} parent=1 // pred_region
      %s373 = ssub.s32 256, 256
      %374 = vsyncadd [#allocation4], %s373
      %s375 = sshll.u32 [#allocation8], 4
      %s376 = int_to_ptr.vmem [resolvable:$true] %s375
      %381 = dma.vmem_to_hbm [thread:$0]  %s376, 256, %s7, [#allocation4], 128, 128, 8
    $region45: #{_forward_impl.1} parent=1 // pred_fallthru
      _
    // Predicated region
    $region46: #{_forward_impl.1} parent=1 // pred_check
      _
    $region47: #{_forward_impl.1} parent=1 // pred_check_branch
      %383 = sbr.rel (0) target = $region49
    $region48: #{_forward_impl.1} parent=1 // pred_region
      %384 = dma.done [#allocation4], 256
    $region49: #{_forward_impl.1} parent=1 // pred_fallthru
      _
    %385 = vsyncpa [#allocation3], 1
    %386 = vsyncpa [#allocation6], 1
    %387 = vsyncpa [#allocation4], 1

</llo_original>
